<compile_context>
chip_gen: v7x
topology: tpu7x:2x2x1
jax: 0.10.0
libtpu: 0.0.40
codegen_flags: <defaults>
</compile_context>

<pallas_src>
import functools
import math

import jax
import jax.numpy as jnp
import numpy as np
from jax.experimental import pallas as pl
from jax.experimental.pallas import tpu as pltpu

FEAT = 4096    # per-SVM feature size (hardcoded in the PyTorch module)
LANES = 128    # TPU lane width; merged output is one lane-dense slab
TB = 8         # batch rows per grid step (fills the 8 sublanes of a vreg)


def _mos_kernel(w_ref, fold_ref, b_ref, vt_ref, x_ref, out_ref, *, n_svms):
    """One grid step: TB batch rows; all weight-side operands VMEM-resident.

    w_ref   : (NR, C)     SVM weights reshaped to full-sublane tiles
    fold_ref: (NR, 128)   0/1 fold matrix: column i sums the R rows of SVM i
    b_ref   : (1, 128)    SVM biases in lanes 0..N-1, zeros elsewhere
    vt_ref  : (128, 128)  vote matrix transposed, embedded in top-left N x N block
    x_ref   : (TB, NR, C) batch tile of inputs (same reshape as w)
    out_ref : (TB, 128)   merged output: lanes 0..N-1 = t, lane N = predict
    """
    # Dominant work: elementwise multiply + lane reduce over the feature axis (VPU/XLU).
    prod = x_ref[...] * w_ref[...]                       # (TB, NR, C)
    rs = jnp.sum(prod, axis=-1)                          # (TB, NR) per-row partial dots

    # t[b, i] = sum of the R partial sums belonging to SVM i + bias_i.
    # Lanes >= N of t_pad stay exactly 0 (fold and bias are zero-padded).
    t_pad = jnp.dot(rs, fold_ref[...],
                    preferred_element_type=jnp.float32) + b_ref[...]   # (TB, 128)

    # vote(t): logits[b, i] = sum_j V[i, j] * t[b, j].  Lanes >= N give
    # sigmoid(0) = 0.5 but are multiplied by t_pad == 0, so they contribute 0.
    logits = jnp.dot(t_pad, vt_ref[...], preferred_element_type=jnp.float32)
    vote_w = jax.nn.sigmoid(logits)                                     # (TB, 128)
    pred = jnp.sum(vote_w * t_pad, axis=-1, keepdims=True)              # (TB, 1)

    # Single unmasked 128-lane store: t in lanes 0..N-1, predict in lane N.
    lane = jax.lax.broadcasted_iota(jnp.int32, (1, LANES), 1)
    pred_slot = jnp.where(lane == n_svms, 1.0, 0.0).astype(jnp.float32)
    out_ref[...] = t_pad + pred * pred_slot


def mos_alter_forward_batched(x_batch, svm_w, svm_b, vote_w):
    """Batched forward.

    x_batch: (B, N*4096) f32; svm_w: (N, 4096); svm_b: (N,); vote_w: (N, N).
    Returns (predict (B,), t (B, N)).
    """
    n = svm_w.shape[0]
    b_total = x_batch.shape[0]

    # Full-sublane packing: R rows per SVM so NR = N*R is a multiple of 8.
    r = 8 // math.gcd(n, 8)
    nr, c = n * r, FEAT // r

    x3 = x_batch.reshape(b_total, nr, c).astype(jnp.float32)
    w2 = svm_w.reshape(nr, c).astype(jnp.float32)

    # Constant side matrices, lane-padded to 128 (zero elsewhere).
    fold_np = np.zeros((nr, LANES), np.float32)
    fold_np[np.arange(nr), np.arange(nr) // r] = 1.0
    fold = jnp.asarray(fold_np)
    bias_row = jnp.zeros((1, LANES), jnp.float32).at[0, :n].set(
        svm_b.astype(jnp.float32))
    vt_big = jnp.zeros((LANES, LANES), jnp.float32).at[:n, :n].set(
        vote_w.T.astype(jnp.float32))

    # Pad the batch to a multiple of TB so every grid block is fully in-bounds.
    b_pad = ((b_total + TB - 1) // TB) * TB
    if b_pad != b_total:
        x3 = jnp.pad(x3, ((0, b_pad - b_total), (0, 0), (0, 0)))

    # VMEM budget: ~132 KiB of resident weights + 2 x 512 KiB streamed x blocks
    # per step — far below the scoped-VMEM default (16 MiB v5e / 32 MiB v6e,v7x).
    # If num_svms grows, the first ceiling is that scoped default (raise
    # vmem_limit_bytes or reintroduce feature-axis tiling around N ~ 512 on v5e),
    # not physical VMEM.
    grid = (b_pad // TB,)
    kernel = functools.partial(_mos_kernel, n_svms=n)

    out = pl.pallas_call(
        kernel,
        grid=grid,
        in_specs=[
            pl.BlockSpec((nr, c), lambda i: (0, 0),
                         memory_space=pltpu.MemorySpace.VMEM),
            pl.BlockSpec((nr, LANES), lambda i: (0, 0),
                         memory_space=pltpu.MemorySpace.VMEM),
            pl.BlockSpec((1, LANES), lambda i: (0, 0),
                         memory_space=pltpu.MemorySpace.VMEM),
            pl.BlockSpec((LANES, LANES), lambda i: (0, 0),
                         memory_space=pltpu.MemorySpace.VMEM),
            pl.BlockSpec((TB, nr, c), lambda i: (i, 0, 0),
                         memory_space=pltpu.MemorySpace.VMEM),
        ],
        out_specs=pl.BlockSpec((TB, LANES), lambda i: (i, 0),
                               memory_space=pltpu.MemorySpace.VMEM),
        out_shape=jax.ShapeDtypeStruct((b_pad, LANES), jnp.float32),
        compiler_params=pltpu.CompilerParams(
            dimension_semantics=("parallel",),   # v7x: split batch across 2 TCs
            vmem_limit_bytes=32 * 1024 * 1024,
        ),
        cost_estimate=pl.CostEstimate(
            flops=2 * b_pad * n * FEAT,
            transcendentals=b_pad * n,
            bytes_accessed=4 * (b_pad * n * FEAT + n * FEAT + b_pad * LANES
                                + nr * LANES + LANES + LANES * LANES),
        ),
    )(w2, fold, bias_row, vt_big, x3)

    t = out[:b_total, :n]          # per-SVM outputs (== concatenated tmp_list)
    predict = out[:b_total, n]     # voted prediction per batch row
    return predict, t


def mos_alter_forward(x_flat, svm_w, svm_b, vote_w):
    """Single-vector forward matching the PyTorch module.

    x_flat: (N*4096,) f32.  Returns (predict (1,), t (N,)).
    t is the concatenation of the per-SVM outputs (== tmp_list entries).
    """
    predict, t = mos_alter_forward_batched(x_flat.reshape(1, -1),
                                           svm_w, svm_b, vote_w)
    return predict.reshape(1), t.reshape(-1)


def _reference_batched(x_batch, svm_w, svm_b, vote_w):
    n = svm_w.shape[0]
    x3 = x_batch.reshape(x_batch.shape[0], n, FEAT)
    t = jnp.einsum("bnf,nf->bn", x3, svm_w) + svm_b          # (B, N)
    vw = jax.nn.sigmoid(t @ vote_w.T)                         # (B, N)
    return jnp.sum(vw * t, axis=-1), t


if __name__ == "__main__":
    num_svms = 4   # small svm_list
    batch = 16     # multiple input vectors per call (amortizes launch + weight DMA)

    key = jax.random.PRNGKey(0)
    k_x, k_w, k_b, k_v, k_g = jax.random.split(key, 5)

    # Deterministic parameter init (synthetic; no checkpoint loading).
    x_batch = jax.random.normal(k_x, (batch, num_svms * FEAT), dtype=jnp.float32)
    svm_w = jax.random.normal(k_w, (num_svms, FEAT), dtype=jnp.float32) * 0.01
    svm_b = jax.random.normal(k_b, (num_svms,), dtype=jnp.float32) * 0.1
    vote_w = jax.random.normal(k_v, (num_svms, num_svms), dtype=jnp.float32) * 0.5
    gate_w = jax.random.normal(k_g, (num_svms, num_svms * FEAT),
                               dtype=jnp.float32) * 0.01  # unused in forward (as in PyTorch)

    # Batched path.
    predict_b, t_b = mos_alter_forward_batched(x_batch, svm_w, svm_b, vote_w)
    jax.block_until_ready(predict_b)
    jax.block_until_ready(t_b)
    ref_pred_b, ref_t_b = _reference_batched(x_batch, svm_w, svm_b, vote_w)
    assert jnp.allclose(predict_b, ref_pred_b, atol=1e-4, rtol=1e-4)
    assert jnp.allclose(t_b, ref_t_b, atol=1e-4, rtol=1e-4)

    # Single-vector path (original module semantics: one X per call).
    x_single = x_batch[0].reshape(-1)
    predict, t = mos_alter_forward(x_single, svm_w, svm_b, vote_w)
    jax.block_until_ready(predict)
    assert jnp.allclose(predict, ref_pred_b[0].reshape(1), atol=1e-4, rtol=1e-4)
    assert jnp.allclose(t, ref_t_b[0], atol=1e-4, rtol=1e-4)

    print("KERNEL_OK")
</pallas_src>

<mosaic_0001>
module attributes {stable_mosaic.version = 11 : i64} {
  func.func @_mos_kernel(%arg0: i32, %arg1: memref<8x2048xf32, #tpu.memory_space<vmem>>, %arg2: memref<8x128xf32, #tpu.memory_space<vmem>>, %arg3: memref<1x128xf32, #tpu.memory_space<vmem>>, %arg4: memref<128x128xf32, #tpu.memory_space<vmem>>, %arg5: memref<8x8x2048xf32, #tpu.memory_space<vmem>>, %arg6: memref<8x128xf32, #tpu.memory_space<vmem>>) attributes {dimension_semantics = [#tpu.dimension_semantics<parallel>], iteration_bounds = array<i64: 2>, scalar_prefetch = 0 : i64, scratch_operands = 0 : i64, tpu.core_type = #tpu.core_type<tc>, window_params = [{pipeline_mode = #tpu.pipeline_mode<synchronous>, transform_indices = @transform_0, window_bounds = array<i64: 8, 2048>}, {pipeline_mode = #tpu.pipeline_mode<synchronous>, transform_indices = @transform_1, window_bounds = array<i64: 8, 128>}, {pipeline_mode = #tpu.pipeline_mode<synchronous>, transform_indices = @transform_2, window_bounds = array<i64: 1, 128>}, {pipeline_mode = #tpu.pipeline_mode<synchronous>, transform_indices = @transform_3, window_bounds = array<i64: 128, 128>}, {transform_indices = @transform_4, window_bounds = array<i64: 8, 8, 2048>}, {transform_indices = @transform_5, window_bounds = array<i64: 8, 128>}]} {
    %c0 = arith.constant 0 : index
    %c0_0 = arith.constant 0 : index
    %c0_1 = arith.constant 0 : index
    %0 = vector.load %arg5[%c0, %c0_0, %c0_1] : memref<8x8x2048xf32, #tpu.memory_space<vmem>>, vector<8x8x2048xf32>
    %c0_2 = arith.constant 0 : index
    %c0_3 = arith.constant 0 : index
    %1 = vector.load %arg1[%c0_2, %c0_3] : memref<8x2048xf32, #tpu.memory_space<vmem>>, vector<8x2048xf32>
    %2 = vector.shape_cast %1 : vector<8x2048xf32> to vector<1x8x2048xf32>
    %3 = vector.broadcast %2 : vector<1x8x2048xf32> to vector<8x8x2048xf32>
    %4 = arith.mulf %0, %3 : vector<8x8x2048xf32>
    %cst = arith.constant dense<0.000000e+00> : vector<8x8xf32>
    %5 = vector.multi_reduction <add>, %4, %cst [2] : vector<8x8x2048xf32> to vector<8x8xf32>
    %c0_4 = arith.constant 0 : index
    %c0_5 = arith.constant 0 : index
    %6 = vector.load %arg2[%c0_4, %c0_5] : memref<8x128xf32, #tpu.memory_space<vmem>>, vector<8x128xf32>
    %cst_6 = arith.constant dense<0.000000e+00> : vector<8x128xf32>
    %7 = tpu.matmul %5, %6, %cst_6 {dimension_numbers = #tpu.dot_dimension_numbers<[1], [0], [0], [1], [0, 0, 1, 1], [], []>} : vector<8x8xf32>, vector<8x128xf32>, vector<8x128xf32> -> vector<8x128xf32>
    %c0_7 = arith.constant 0 : index
    %c0_8 = arith.constant 0 : index
    %8 = vector.load %arg3[%c0_7, %c0_8] : memref<1x128xf32, #tpu.memory_space<vmem>>, vector<1x128xf32>
    %9 = vector.broadcast %8 : vector<1x128xf32> to vector<8x128xf32>
    %10 = arith.addf %7, %9 : vector<8x128xf32>
    %c0_9 = arith.constant 0 : index
    %c0_10 = arith.constant 0 : index
    %11 = vector.load %arg4[%c0_9, %c0_10] : memref<128x128xf32, #tpu.memory_space<vmem>>, vector<128x128xf32>
    %cst_11 = arith.constant dense<0.000000e+00> : vector<8x128xf32>
    %12 = tpu.matmul %10, %11, %cst_11 {dimension_numbers = #tpu.dot_dimension_numbers<[1], [0], [0], [1], [0, 0, 1, 1], [], []>} : vector<8x128xf32>, vector<128x128xf32>, vector<8x128xf32> -> vector<8x128xf32>
    %13 = arith.negf %12 : vector<8x128xf32>
    %14 = math.exp %13 : vector<8x128xf32>
    %cst_12 = arith.constant 1.000000e+00 : f32
    %15 = vector.broadcast %cst_12 : f32 to vector<8x128xf32>
    %16 = arith.addf %15, %14 : vector<8x128xf32>
    %17 = arith.divf %15, %16 : vector<8x128xf32>
    %18 = arith.mulf %17, %10 : vector<8x128xf32>
    %cst_13 = arith.constant dense<0.000000e+00> : vector<8xf32>
    %19 = vector.multi_reduction <add>, %18, %cst_13 [1] : vector<8x128xf32> to vector<8xf32>
    %20 = vector.shape_cast %19 : vector<8xf32> to vector<8x1xf32>
    %21 = tpu.iota {dimensions = array<i32: 1>} : vector<1x128xi32>
    %c4_i32 = arith.constant 4 : i32
    %22 = vector.broadcast %c4_i32 : i32 to vector<1x128xi32>
    %23 = arith.cmpi eq, %21, %22 : vector<1x128xi32>
    %cst_14 = arith.constant 1.000000e+00 : f32
    %cst_15 = arith.constant 0.000000e+00 : f32
    %24 = vector.broadcast %cst_14 : f32 to vector<1x128xf32>
    %25 = vector.broadcast %cst_15 : f32 to vector<1x128xf32>
    %26 = arith.select %23, %24, %25 : vector<1x128xi1>, vector<1x128xf32>
    %27 = vector.broadcast %20 : vector<8x1xf32> to vector<8x128xf32>
    %28 = vector.broadcast %26 : vector<1x128xf32> to vector<8x128xf32>
    %29 = arith.mulf %27, %28 : vector<8x128xf32>
    %30 = arith.addf %10, %29 : vector<8x128xf32>
    %c0_16 = arith.constant 0 : index
    %c0_17 = arith.constant 0 : index
    %31 = vector.load %arg6[%c0_16, %c0_17] : memref<8x128xf32, #tpu.memory_space<vmem>>, vector<8x128xf32>
    tpu.vector_store %arg6[%c0_16, %c0_17], %30 {strides = array<i32>} : memref<8x128xf32, #tpu.memory_space<vmem>>, vector<8x128xf32>,
    return
  }
  func.func @transform_0(%arg0: i32) -> (i32, i32) {
    %c0_i32 = arith.constant 0 : i32
    %c0_i32_0 = arith.constant 0 : i32
    %c0_i32_1 = arith.constant 0 : i32
    return %c0_i32, %c0_i32_0 : i32, i32
  }
  func.func @transform_1(%arg0: i32) -> (i32, i32) {
    %c0_i32 = arith.constant 0 : i32
    %c0_i32_0 = arith.constant 0 : i32
    %c0_i32_1 = arith.constant 0 : i32
    return %c0_i32, %c0_i32_0 : i32, i32
  }
  func.func @transform_2(%arg0: i32) -> (i32, i32) {
    %c0_i32 = arith.constant 0 : i32
    %c0_i32_0 = arith.constant 0 : i32
    %c0_i32_1 = arith.constant 0 : i32
    return %c0_i32, %c0_i32_0 : i32, i32
  }
  func.func @transform_3(%arg0: i32) -> (i32, i32) {
    %c0_i32 = arith.constant 0 : i32
    %c0_i32_0 = arith.constant 0 : i32
    %c0_i32_1 = arith.constant 0 : i32
    return %c0_i32, %c0_i32_0 : i32, i32
  }
  func.func @transform_4(%arg0: i32) -> (i32, i32, i32) {
    %c0_i32 = arith.constant 0 : i32
    %c0_i32_0 = arith.constant 0 : i32
    %c0_i32_1 = arith.constant 0 : i32
    return %arg0, %c0_i32, %c0_i32_0 : i32, i32, i32
  }
  func.func @transform_5(%arg0: i32) -> (i32, i32) {
    %c0_i32 = arith.constant 0 : i32
    %c0_i32_0 = arith.constant 0 : i32
    return %arg0, %c0_i32 : i32, i32
  }
}

</mosaic_0001>

<llo_original>
// kernel: tpu_custom_call.1
$region0: #{tpu_custom_call.1}
  #allocation0 [shape = 'u32[]', space=smem, size = 0x4, offset = 0x4, fixed_abs, tag = 'smem constant byte address 0x4 - core index']
  #allocation1 [shape = 'u32[144,128]{1,0:T(1,128)}', space=vmem, size = 0x12000, scoped, tag = 'internal scratch']
  %s0 = inlined_call_operand.hbm [shape: f32[8,2048], index: 0, kind: input, shape index: {}]
  %s1 = inlined_call_operand.hbm [shape: f32[8,128], index: 1, kind: input, shape index: {}]
  %s2 = inlined_call_operand.vmem [shape: f32[1,128], index: 2, kind: input, shape index: {}]
  %s3 = inlined_call_operand.hbm [shape: f32[128,128], index: 3, kind: input, shape index: {}]
  %s4 = inlined_call_operand.hbm [shape: f32[16,8,2048], index: 4, kind: input, shape index: {}]
  %s5 = inlined_call_operand.hbm [shape: f32[16,128], index: 5, kind: output, shape index: {}]
  %s6 = sld [smem:[#allocation0]]
  $region69: #{tpu_custom_call.1} parent=0
    _
  %s8 = ssub.s32 1, %s6
  %s9 = scalar_select 0, %s8, %s6
  $region1: #{tpu_custom_call.1} parent=0
    #allocation2 [shape = 'u8[65536]{0}', space=vmem, size = 0x10000, scoped, tag = 'input window, operand 0, single buffered']
    #allocation3 [shape = 's32[2]{0}', space=sflag, size = 0x8, scoped, tag = 'scoped memory for tpu_custom_call.1']
    #allocation4 [shape = 's32[2]{0}', space=sflag, size = 0x8, scoped, tag = 'scoped memory for tpu_custom_call.1']
    #allocation5 [shape = 'u8[4096]{0}', space=vmem, size = 0x1000, scoped, tag = 'input window, operand 1, single buffered']
    #allocation6 [shape = 's32[1]{0}', space=sflag, size = 0x4, scoped, tag = 'scoped memory for tpu_custom_call.1']
    #allocation7 [shape = 'u8[65536]{0}', space=vmem, size = 0x10000, scoped, tag = 'input window, operand 3, single buffered']
    #allocation8 [shape = 'u8[1048576]{0}', space=vmem, size = 0x100000, scoped, tag = 'input window, operand 4']
    #allocation9 [shape = 's32[2]{0}', space=sflag, size = 0x8, scoped, tag = 'scoped memory for tpu_custom_call.1']
    #allocation10 [shape = 'u8[8192]{0}', space=vmem, size = 0x2000, scoped, tag = 'output window, operand 0']
    %10 = vsyncpa [#allocation3], 0
    %11 = vsyncpa [#allocation6], 0
    %12 = vsyncpa [#allocation9], 0
    %s13 = scalar_lea.sflag [#allocation9], 1
    %14 = vsyncpa %s13, 0
    %15 = vsyncpa [#allocation4], 0
    %s16 = scalar_lea.sflag [#allocation4], 1
    %17 = vsyncpa %s16, 0
    loop: start=0, step=1, limit=4
    $region2: #{tpu_custom_call.1} parent=1 // loop_pre_header
      _
    $region3: #{tpu_custom_call.1} parent=1 // loop_header
      %s19 = sphi 0, %s23
      %p20 = scmp.ge.s32.totalorder %s19, 4
      %s27 = sphi 0, %s27
      %s29 = sphi 0, %s27
      %s30 = sphi 0, %s29
      %s44 = sphi 0, %s30
      %s48 = sphi 0, %s48
      %s50 = sphi 0, %s48
      %s51 = sphi 0, %s50
      %s65 = sphi 0, %s51
      %s69 = sphi 0, %s69
      %s71 = sphi 0, %s69
      %s72 = sphi 0, %s71
      %s86 = sphi 0, %s72
      %s90 = sphi 0, %s90
      %s92 = sphi 0, %s90
      %s93 = sphi 0, %s92
      %s107 = sphi 0, %s93
      %s113 = sphi 0, %s115
      %s116 = sphi 0, %s113
      %s117 = sphi 0, %s116
      %s133 = sphi 0, %s117
      %s139 = sphi 0, %s141
      %s142 = sphi 0, %s139
      %s143 = sphi 0, %s142
      %s159 = sphi 0, %s143
    $region4: #{tpu_custom_call.1} parent=1 // loop_header_branch
      %22 = sbr.rel (%p20) target = $region8
    $region5: #{tpu_custom_call.1} parent=1 // loop_body
      %s24 = ssub.s32 %s19, 1
      %s25 = ssub.s32 %s19, 2
      %s26 = sadd.s32 %s19, 1
      %s28 = sadd.s32 %s27, 1
      %p31 = scmp.eq.s32.totalorder %s19, 1
      %p32 = scmp.ne.s32.totalorder %s27, %s29
      %p33 = scmp.eq.s32.totalorder %s19, 0
      %p34 = por %p32, %p33
      %p35 = scmp.ne.s32.totalorder %s27, %s29
      %p36 = scmp.eq.s32.totalorder %s24, 1
      %p37 = por %p35, %p36
      %p38 = scmp.ne.s32.totalorder %s29, %s30
      %p39 = scmp.eq.s32.totalorder %s24, 0
      %p40 = por %p38, %p39
      %p41 = scmp.ne.s32.totalorder %s29, %s30
      %p42 = scmp.eq.s32.totalorder %s25, 1
      %p43 = por %p41, %p42
      %p45 = scmp.ne.s32.totalorder %s30, %s44
      %p46 = scmp.eq.s32.totalorder %s25, 0
      %p47 = por %p45, %p46
      %s49 = sadd.s32 %s48, 1
      %p52 = scmp.eq.s32.totalorder %s19, 1
      %p53 = scmp.ne.s32.totalorder %s48, %s50
      %p54 = scmp.eq.s32.totalorder %s19, 0
      %p55 = por %p53, %p54
      %p56 = scmp.ne.s32.totalorder %s48, %s50
      %p57 = scmp.eq.s32.totalorder %s24, 1
      %p58 = por %p56, %p57
      %p59 = scmp.ne.s32.totalorder %s50, %s51
      %p60 = scmp.eq.s32.totalorder %s24, 0
      %p61 = por %p59, %p60
      %p62 = scmp.ne.s32.totalorder %s50, %s51
      %p63 = scmp.eq.s32.totalorder %s25, 1
      %p64 = por %p62, %p63
      %p66 = scmp.ne.s32.totalorder %s51, %s65
      %p67 = scmp.eq.s32.totalorder %s25, 0
      %p68 = por %p66, %p67
      %s70 = sadd.s32 %s69, 1
      %p73 = scmp.eq.s32.totalorder %s19, 1
      %p74 = scmp.ne.s32.totalorder %s69, %s71
      %p75 = scmp.eq.s32.totalorder %s19, 0
      %p76 = por %p74, %p75
      %p77 = scmp.ne.s32.totalorder %s69, %s71
      %p78 = scmp.eq.s32.totalorder %s24, 1
      %p79 = por %p77, %p78
      %p80 = scmp.ne.s32.totalorder %s71, %s72
      %p81 = scmp.eq.s32.totalorder %s24, 0
      %p82 = por %p80, %p81
      %p83 = scmp.ne.s32.totalorder %s71, %s72
      %p84 = scmp.eq.s32.totalorder %s25, 1
      %p85 = por %p83, %p84
      %p87 = scmp.ne.s32.totalorder %s72, %s86
      %p88 = scmp.eq.s32.totalorder %s25, 0
      %p89 = por %p87, %p88
      %s91 = sadd.s32 %s90, 1
      %p94 = scmp.eq.s32.totalorder %s19, 1
      %p95 = scmp.ne.s32.totalorder %s90, %s92
      %p96 = scmp.eq.s32.totalorder %s19, 0
      %p97 = por %p95, %p96
      %p98 = scmp.ne.s32.totalorder %s90, %s92
      %p99 = scmp.eq.s32.totalorder %s24, 1
      %p100 = por %p98, %p99
      %p101 = scmp.ne.s32.totalorder %s92, %s93
      %p102 = scmp.eq.s32.totalorder %s24, 0
      %p103 = por %p101, %p102
      %p104 = scmp.ne.s32.totalorder %s92, %s93
      %p105 = scmp.eq.s32.totalorder %s25, 1
      %p106 = por %p104, %p105
      %p108 = scmp.ne.s32.totalorder %s93, %s107
      %p109 = scmp.eq.s32.totalorder %s25, 0
      %p110 = por %p108, %p109
      %s111 = ssub.s32 %s19, %s26
      %p112 = scmp.eq.s32.totalorder %s111, 0
      %s114 = sadd.s32 %s113, 1
      %s115 = scalar_select %p112, %s113, %s114
      %p118 = pneg %p112
      %p119 = scmp.eq.s32.totalorder %s19, 1
      %p120 = por %p118, %p119
      %p121 = scmp.ne.s32.totalorder %s113, %s116
      %p122 = scmp.eq.s32.totalorder %s19, 0
      %p123 = por %p121, %p122
      %p124 = scmp.ne.s32.totalorder %s113, %s116
      %p125 = scmp.eq.s32.totalorder %s24, 1
      %p126 = por %p124, %p125
      %p127 = scmp.ne.s32.totalorder %s116, %s117
      %p128 = scmp.eq.s32.totalorder %s24, 0
      %p129 = por %p127, %p128
      %p130 = scmp.ne.s32.totalorder %s116, %s117
      %p131 = scmp.eq.s32.totalorder %s25, 1
      %p132 = por %p130, %p131
      %p134 = scmp.ne.s32.totalorder %s117, %s133
      %p135 = scmp.eq.s32.totalorder %s25, 0
      %p136 = por %p134, %p135
      %s137 = ssub.s32 %s19, %s26
      %p138 = scmp.eq.s32.totalorder %s137, 0
      %s140 = sadd.s32 %s139, 1
      %s141 = scalar_select %p138, %s139, %s140
      %p144 = pneg %p138
      %p145 = scmp.eq.s32.totalorder %s19, 1
      %p146 = por %p144, %p145
      %p147 = scmp.ne.s32.totalorder %s139, %s142
      %p148 = scmp.eq.s32.totalorder %s19, 0
      %p149 = por %p147, %p148
      %p150 = scmp.ne.s32.totalorder %s139, %s142
      %p151 = scmp.eq.s32.totalorder %s24, 1
      %p152 = por %p150, %p151
      %p153 = scmp.ne.s32.totalorder %s142, %s143
      %p154 = scmp.eq.s32.totalorder %s24, 0
      %p155 = por %p153, %p154
      %p156 = scmp.ne.s32.totalorder %s142, %s143
      %p157 = scmp.eq.s32.totalorder %s25, 1
      %p158 = por %p156, %p157
      %p160 = scmp.ne.s32.totalorder %s143, %s159
      %p161 = scmp.eq.s32.totalorder %s25, 0
      %p162 = por %p160, %p161
      %p163 = scmp.le.s32.totalorder 1, %s19
      %p164 = scmp.lt.s32.totalorder %s19, 3
      %p165 = pnand %p163, %p164
      %p166 = pneg %p165
      // Predicated region
      $region9: #{tpu_custom_call.1} parent=5 // pred_check
        _
      $region10: #{tpu_custom_call.1} parent=5 // pred_check_branch
        %168 = sbr.rel (%p165) target = $region12
      $region11: #{tpu_custom_call.1} parent=5 // pred_region
        %s169 = ssub.s32 %s19, 1
        // Predicated region
        $region13: #{tpu_custom_call.1} parent=11 // pred_check
          %p170 = pneg %p40
        $region14: #{tpu_custom_call.1} parent=11 // pred_check_branch
          %172 = sbr.rel (%p170) target = $region16
        $region15: #{tpu_custom_call.1} parent=11 // pred_region
          %s174 = ssub.s32 2048, 2048
          %175 = vsyncadd [#allocation3], %s174
          %s177 = sshll.u32 [#allocation2], 4
          %s178 = int_to_ptr.vmem [resolvable:$true] %s177
          %180 = dma.hbm_to_vmem [thread:$0]  %s0, 2048, %s178, [#allocation3]
        $region16: #{tpu_custom_call.1} parent=11 // pred_fallthru
          _
        // Predicated region
        $region17: #{tpu_custom_call.1} parent=11 // pred_check
          %p181 = pneg %p61
        $region18: #{tpu_custom_call.1} parent=11 // pred_check_branch
          %183 = sbr.rel (%p181) target = $region20
        $region19: #{tpu_custom_call.1} parent=11 // pred_region
          %s185 = ssub.s32 128, 128
          %186 = vsyncadd [#allocation6], %s185
          %s188 = sshll.u32 [#allocation5], 4
          %s189 = int_to_ptr.vmem [resolvable:$true] %s188
          %191 = dma.hbm_to_vmem [thread:$0]  %s1, 128, %s189, [#allocation6]
        $region20: #{tpu_custom_call.1} parent=11 // pred_fallthru
          _
        // Predicated region
        $region21: #{tpu_custom_call.1} parent=11 // pred_check
          %p192 = pneg %p82
        $region22: #{tpu_custom_call.1} parent=11 // pred_check_branch
          %194 = sbr.rel (%p192) target = $region24
        $region23: #{tpu_custom_call.1} parent=11 // pred_region
          _
        $region24: #{tpu_custom_call.1} parent=11 // pred_fallthru
          _
        // Predicated region
        $region25: #{tpu_custom_call.1} parent=11 // pred_check
          %p195 = pneg %p103
        $region26: #{tpu_custom_call.1} parent=11 // pred_check_branch
          %197 = sbr.rel (%p195) target = $region28
        $region27: #{tpu_custom_call.1} parent=11 // pred_region
          %s199 = ssub.s32 2048, 2048
          %200 = vsyncadd [#allocation6], %s199
          %s201 = sshll.u32 [#allocation7], 4
          %s202 = int_to_ptr.vmem [resolvable:$true] %s201
          %207 = dma.hbm_to_vmem [thread:$0]  %s3, 2048, %s202, [#allocation6], 128, 128, 8
        $region28: #{tpu_custom_call.1} parent=11 // pred_fallthru
          _
      $region12: #{tpu_custom_call.1} parent=5 // pred_fallthru
        _
      %p208 = scmp.lt.s32.totalorder %s19, 2
      // Predicated region
      $region29: #{tpu_custom_call.1} parent=5 // pred_check
        %p209 = pneg %p208
      $region30: #{tpu_custom_call.1} parent=5 // pred_check_branch
        %211 = sbr.rel (%p209) target = $region32
      $region31: #{tpu_custom_call.1} parent=5 // pred_region
        // Predicated region
        $region33: #{tpu_custom_call.1} parent=31 // pred_check
          %p212 = pneg %p123
        $region34: #{tpu_custom_call.1} parent=31 // pred_check_branch
          %214 = sbr.rel (%p212) target = $region36
        $region35: #{tpu_custom_call.1} parent=31 // pred_region
          %s215 = sand.u32 %s113, 1
          %s216 = scalar_lea.sflag [#allocation9], %s215
          %s217 = sand.u32 %s113, 1
          %s218 = smul.addr %s217, 1024
          %s219 = scalar_lea.vmem [#allocation8], %s218
          %s220 = smul.u32 8, %s19
          %s222 = ssub.s32 16384, 16384
          %223 = vsyncadd %s216, %s222
          %s224 = smul.addr %s220, 16
          %s225 = smul.addr %s224, 128
          %s226 = scalar_lea.hbm %s4, %s225
          %s227 = sshll.u32 %s219, 4
          %s228 = int_to_ptr.vmem [resolvable:$true] %s227
          %233 = dma.hbm_to_vmem [thread:$0]  %s226, 16384, %s228, %s216, 2048, 2048, 128
        $region36: #{tpu_custom_call.1} parent=31 // pred_fallthru
          _
      $region32: #{tpu_custom_call.1} parent=5 // pred_fallthru
        _
      %p234 = scmp.le.s32.totalorder 1, %s19
      %p235 = scmp.lt.s32.totalorder %s19, 3
      %p236 = pnand %p234, %p235
      %p237 = pneg %p236
      // Predicated region
      $region37: #{tpu_custom_call.1} parent=5 // pred_check
        _
      $region38: #{tpu_custom_call.1} parent=5 // pred_check_branch
        %239 = sbr.rel (%p236) target = $region40
      $region39: #{tpu_custom_call.1} parent=5 // pred_region
        %s240 = ssub.s32 %s19, 1
        // Predicated region
        $region41: #{tpu_custom_call.1} parent=39 // pred_check
          %p241 = pneg %p40
        $region42: #{tpu_custom_call.1} parent=39 // pred_check_branch
          %243 = sbr.rel (%p241) target = $region44
        $region43: #{tpu_custom_call.1} parent=39 // pred_region
          %244 = dma.done [#allocation3], 2048
        $region44: #{tpu_custom_call.1} parent=39 // pred_fallthru
          _
        // Predicated region
        $region45: #{tpu_custom_call.1} parent=39 // pred_check
          %p245 = pneg %p61
        $region46: #{tpu_custom_call.1} parent=39 // pred_check_branch
          %247 = sbr.rel (%p245) target = $region48
        $region47: #{tpu_custom_call.1} parent=39 // pred_region
          %248 = dma.done [#allocation6], 128
        $region48: #{tpu_custom_call.1} parent=39 // pred_fallthru
          _
        // Predicated region
        $region49: #{tpu_custom_call.1} parent=39 // pred_check
          %p249 = pneg %p103
        $region50: #{tpu_custom_call.1} parent=39 // pred_check_branch
          %251 = sbr.rel (%p249) target = $region52
        $region51: #{tpu_custom_call.1} parent=39 // pred_region
          %252 = dma.done [#allocation6], 2048
        $region52: #{tpu_custom_call.1} parent=39 // pred_fallthru
          _
        %s253 = sand.u32 %s116, 1
        %s254 = scalar_lea.sflag [#allocation9], %s253
        %s255 = sand.u32 %s116, 1
        %s256 = smul.addr %s255, 1024
        %s257 = scalar_lea.vmem [#allocation8], %s256
        // Predicated region
        $region53: #{tpu_custom_call.1} parent=39 // pred_check
          %p258 = pneg %p129
        $region54: #{tpu_custom_call.1} parent=39 // pred_check_branch
          %260 = sbr.rel (%p258) target = $region56
        $region55: #{tpu_custom_call.1} parent=39 // pred_region
          %261 = dma.done %s254, 16384
        $region56: #{tpu_custom_call.1} parent=39 // pred_fallthru
          _
        %p262 = pneg %p40
        %p263 = pneg %p37
        %p264 = pneg %p61
        %p265 = pneg %p58
        %p266 = pneg %p82
        %p267 = pneg %p79
        %p268 = pneg %p103
        %p269 = pneg %p100
        %s270 = sand.u32 %s116, 1
        %s271 = scalar_lea.sflag [#allocation9], %s270
        %s272 = sand.u32 %s116, 1
        %s273 = smul.addr %s272, 1024
        %s274 = scalar_lea.vmem [#allocation8], %s273
        %p275 = pneg %p129
        %p276 = pneg %p126
        %p277 = pneg %p155
        %p278 = pneg %p152
        %s279 = sand.u32 %s142, 1
        %s280 = scalar_lea.sflag [#allocation4], %s279
        %s281 = sand.u32 %s142, 1
        %s282 = smul.addr %s281, 8
        %s283 = scalar_lea.vmem [#allocation10], %s282
        %s284 = smul.u32 8, %s24
        %v285 = vld [vmem:[%s257] sm:$0xff]
        %v286 = vld [vmem:[%s257 + $0x8] sm:$0xff]
        %v287 = vld [vmem:[%s257 + $0x10] sm:$0xff]
        %v288 = vld [vmem:[%s257 + $0x18] sm:$0xff]
        %v289 = vld [vmem:[%s257 + $0x20] sm:$0xff]
        %v290 = vld [vmem:[%s257 + $0x28] sm:$0xff]
        %v291 = vld [vmem:[%s257 + $0x30] sm:$0xff]
        %v292 = vld [vmem:[%s257 + $0x38] sm:$0xff]
        %v293 = vld [vmem:[%s257 + $0x40] sm:$0xff]
        %v294 = vld [vmem:[%s257 + $0x48] sm:$0xff]
        %v295 = vld [vmem:[%s257 + $0x50] sm:$0xff]
        %v296 = vld [vmem:[%s257 + $0x58] sm:$0xff]
        %v297 = vld [vmem:[%s257 + $0x60] sm:$0xff]
        %v298 = vld [vmem:[%s257 + $0x68] sm:$0xff]
        %v299 = vld [vmem:[%s257 + $0x70] sm:$0xff]
        %v300 = vld [vmem:[%s257 + $0x78] sm:$0xff]
        %v301 = vld [vmem:[%s257 + $0x80] sm:$0xff]
        %v302 = vld [vmem:[%s257 + $0x88] sm:$0xff]
        %v303 = vld [vmem:[%s257 + $0x90] sm:$0xff]
        %v304 = vld [vmem:[%s257 + $0x98] sm:$0xff]
        %v305 = vld [vmem:[%s257 + $0xa0] sm:$0xff]
        %v306 = vld [vmem:[%s257 + $0xa8] sm:$0xff]
        %v307 = vld [vmem:[%s257 + $0xb0] sm:$0xff]
        %v308 = vld [vmem:[%s257 + $0xb8] sm:$0xff]
        %v309 = vld [vmem:[%s257 + $0xc0] sm:$0xff]
        %v310 = vld [vmem:[%s257 + $0xc8] sm:$0xff]
        %v311 = vld [vmem:[%s257 + $0xd0] sm:$0xff]
        %v312 = vld [vmem:[%s257 + $0xd8] sm:$0xff]
        %v313 = vld [vmem:[%s257 + $0xe0] sm:$0xff]
        %v314 = vld [vmem:[%s257 + $0xe8] sm:$0xff]
        %v315 = vld [vmem:[%s257 + $0xf0] sm:$0xff]
        %v316 = vld [vmem:[%s257 + $0xf8] sm:$0xff]
        %v317 = vld [vmem:[%s257 + $0x100] sm:$0xff]
        %v318 = vld [vmem:[%s257 + $0x108] sm:$0xff]
        %v319 = vld [vmem:[%s257 + $0x110] sm:$0xff]
        %v320 = vld [vmem:[%s257 + $0x118] sm:$0xff]
        %v321 = vld [vmem:[%s257 + $0x120] sm:$0xff]
        %v322 = vld [vmem:[%s257 + $0x128] sm:$0xff]
        %v323 = vld [vmem:[%s257 + $0x130] sm:$0xff]
        %v324 = vld [vmem:[%s257 + $0x138] sm:$0xff]
        %v325 = vld [vmem:[%s257 + $0x140] sm:$0xff]
        %v326 = vld [vmem:[%s257 + $0x148] sm:$0xff]
        %v327 = vld [vmem:[%s257 + $0x150] sm:$0xff]
        %v328 = vld [vmem:[%s257 + $0x158] sm:$0xff]
        %v329 = vld [vmem:[%s257 + $0x160] sm:$0xff]
        %v330 = vld [vmem:[%s257 + $0x168] sm:$0xff]
        %v331 = vld [vmem:[%s257 + $0x170] sm:$0xff]
        %v332 = vld [vmem:[%s257 + $0x178] sm:$0xff]
        %v333 = vld [vmem:[%s257 + $0x180] sm:$0xff]
        %v334 = vld [vmem:[%s257 + $0x188] sm:$0xff]
        %v335 = vld [vmem:[%s257 + $0x190] sm:$0xff]
        %v336 = vld [vmem:[%s257 + $0x198] sm:$0xff]
        %v337 = vld [vmem:[%s257 + $0x1a0] sm:$0xff]
        %v338 = vld [vmem:[%s257 + $0x1a8] sm:$0xff]
        %v339 = vld [vmem:[%s257 + $0x1b0] sm:$0xff]
        %v340 = vld [vmem:[%s257 + $0x1b8] sm:$0xff]
        %v341 = vld [vmem:[%s257 + $0x1c0] sm:$0xff]
        %v342 = vld [vmem:[%s257 + $0x1c8] sm:$0xff]
        %v343 = vld [vmem:[%s257 + $0x1d0] sm:$0xff]
        %v344 = vld [vmem:[%s257 + $0x1d8] sm:$0xff]
        %v345 = vld [vmem:[%s257 + $0x1e0] sm:$0xff]
        %v346 = vld [vmem:[%s257 + $0x1e8] sm:$0xff]
        %v347 = vld [vmem:[%s257 + $0x1f0] sm:$0xff]
        %v348 = vld [vmem:[%s257 + $0x1f8] sm:$0xff]
        %v349 = vld [vmem:[%s257 + $0x200] sm:$0xff]
        %v350 = vld [vmem:[%s257 + $0x208] sm:$0xff]
        %v351 = vld [vmem:[%s257 + $0x210] sm:$0xff]
        %v352 = vld [vmem:[%s257 + $0x218] sm:$0xff]
        %v353 = vld [vmem:[%s257 + $0x220] sm:$0xff]
        %v354 = vld [vmem:[%s257 + $0x228] sm:$0xff]
        %v355 = vld [vmem:[%s257 + $0x230] sm:$0xff]
        %v356 = vld [vmem:[%s257 + $0x238] sm:$0xff]
        %v357 = vld [vmem:[%s257 + $0x240] sm:$0xff]
        %v358 = vld [vmem:[%s257 + $0x248] sm:$0xff]
        %v359 = vld [vmem:[%s257 + $0x250] sm:$0xff]
        %v360 = vld [vmem:[%s257 + $0x258] sm:$0xff]
        %v361 = vld [vmem:[%s257 + $0x260] sm:$0xff]
        %v362 = vld [vmem:[%s257 + $0x268] sm:$0xff]
        %v363 = vld [vmem:[%s257 + $0x270] sm:$0xff]
        %v364 = vld [vmem:[%s257 + $0x278] sm:$0xff]
        %v365 = vld [vmem:[%s257 + $0x280] sm:$0xff]
        %v366 = vld [vmem:[%s257 + $0x288] sm:$0xff]
        %v367 = vld [vmem:[%s257 + $0x290] sm:$0xff]
        %v368 = vld [vmem:[%s257 + $0x298] sm:$0xff]
        %v369 = vld [vmem:[%s257 + $0x2a0] sm:$0xff]
        %v370 = vld [vmem:[%s257 + $0x2a8] sm:$0xff]
        %v371 = vld [vmem:[%s257 + $0x2b0] sm:$0xff]
        %v372 = vld [vmem:[%s257 + $0x2b8] sm:$0xff]
        %v373 = vld [vmem:[%s257 + $0x2c0] sm:$0xff]
        %v374 = vld [vmem:[%s257 + $0x2c8] sm:$0xff]
        %v375 = vld [vmem:[%s257 + $0x2d0] sm:$0xff]
        %v376 = vld [vmem:[%s257 + $0x2d8] sm:$0xff]
        %v377 = vld [vmem:[%s257 + $0x2e0] sm:$0xff]
        %v378 = vld [vmem:[%s257 + $0x2e8] sm:$0xff]
        %v379 = vld [vmem:[%s257 + $0x2f0] sm:$0xff]
        %v380 = vld [vmem:[%s257 + $0x2f8] sm:$0xff]
        %v381 = vld [vmem:[%s257 + $0x300] sm:$0xff]
        %v382 = vld [vmem:[%s257 + $0x308] sm:$0xff]
        %v383 = vld [vmem:[%s257 + $0x310] sm:$0xff]
        %v384 = vld [vmem:[%s257 + $0x318] sm:$0xff]
        %v385 = vld [vmem:[%s257 + $0x320] sm:$0xff]
        %v386 = vld [vmem:[%s257 + $0x328] sm:$0xff]
        %v387 = vld [vmem:[%s257 + $0x330] sm:$0xff]
        %v388 = vld [vmem:[%s257 + $0x338] sm:$0xff]
        %v389 = vld [vmem:[%s257 + $0x340] sm:$0xff]
        %v390 = vld [vmem:[%s257 + $0x348] sm:$0xff]
        %v391 = vld [vmem:[%s257 + $0x350] sm:$0xff]
        %v392 = vld [vmem:[%s257 + $0x358] sm:$0xff]
        %v393 = vld [vmem:[%s257 + $0x360] sm:$0xff]
        %v394 = vld [vmem:[%s257 + $0x368] sm:$0xff]
        %v395 = vld [vmem:[%s257 + $0x370] sm:$0xff]
        %v396 = vld [vmem:[%s257 + $0x378] sm:$0xff]
        %v397 = vld [vmem:[%s257 + $0x380] sm:$0xff]
        %v398 = vld [vmem:[%s257 + $0x388] sm:$0xff]
        %v399 = vld [vmem:[%s257 + $0x390] sm:$0xff]
        %v400 = vld [vmem:[%s257 + $0x398] sm:$0xff]
        %v401 = vld [vmem:[%s257 + $0x3a0] sm:$0xff]
        %v402 = vld [vmem:[%s257 + $0x3a8] sm:$0xff]
        %v403 = vld [vmem:[%s257 + $0x3b0] sm:$0xff]
        %v404 = vld [vmem:[%s257 + $0x3b8] sm:$0xff]
        %v405 = vld [vmem:[%s257 + $0x3c0] sm:$0xff]
        %v406 = vld [vmem:[%s257 + $0x3c8] sm:$0xff]
        %v407 = vld [vmem:[%s257 + $0x3d0] sm:$0xff]
        %v408 = vld [vmem:[%s257 + $0x3d8] sm:$0xff]
        %v409 = vld [vmem:[%s257 + $0x3e0] sm:$0xff]
        %v410 = vld [vmem:[%s257 + $0x3e8] sm:$0xff]
        %v411 = vld [vmem:[%s257 + $0x3f0] sm:$0xff]
        %v412 = vld [vmem:[%s257 + $0x3f8] sm:$0xff]
        %v413 = vld [vmem:[#allocation2] sm:$0xff]
        %v414 = vld [vmem:[#allocation2 + $0x8] sm:$0xff]
        %v415 = vld [vmem:[#allocation2 + $0x10] sm:$0xff]
        %v416 = vld [vmem:[#allocation2 + $0x18] sm:$0xff]
        %v417 = vld [vmem:[#allocation2 + $0x20] sm:$0xff]
        %v418 = vld [vmem:[#allocation2 + $0x28] sm:$0xff]
        %v419 = vld [vmem:[#allocation2 + $0x30] sm:$0xff]
        %v420 = vld [vmem:[#allocation2 + $0x38] sm:$0xff]
        %v421 = vld [vmem:[#allocation2 + $0x40] sm:$0xff]
        %v422 = vld [vmem:[#allocation2 + $0x48] sm:$0xff]
        %v423 = vld [vmem:[#allocation2 + $0x50] sm:$0xff]
        %v424 = vld [vmem:[#allocation2 + $0x58] sm:$0xff]
        %v425 = vld [vmem:[#allocation2 + $0x60] sm:$0xff]
        %v426 = vld [vmem:[#allocation2 + $0x68] sm:$0xff]
        %v427 = vld [vmem:[#allocation2 + $0x70] sm:$0xff]
        %v428 = vld [vmem:[#allocation2 + $0x78] sm:$0xff]
        %v429 = vmul.f32 %v285, %v413
        %v430 = vmul.f32 %v286, %v414
        %v431 = vmul.f32 %v287, %v415
        %v432 = vmul.f32 %v288, %v416
        %v433 = vmul.f32 %v289, %v417
        %v434 = vmul.f32 %v290, %v418
        %v435 = vmul.f32 %v291, %v419
        %v436 = vmul.f32 %v292, %v420
        %v437 = vmul.f32 %v293, %v421
        %v438 = vmul.f32 %v294, %v422
        %v439 = vmul.f32 %v295, %v423
        %v440 = vmul.f32 %v296, %v424
        %v441 = vmul.f32 %v297, %v425
        %v442 = vmul.f32 %v298, %v426
        %v443 = vmul.f32 %v299, %v427
        %v444 = vmul.f32 %v300, %v428
        %v445 = vmul.f32 %v301, %v413
        %v446 = vmul.f32 %v302, %v414
        %v447 = vmul.f32 %v303, %v415
        %v448 = vmul.f32 %v304, %v416
        %v449 = vmul.f32 %v305, %v417
        %v450 = vmul.f32 %v306, %v418
        %v451 = vmul.f32 %v307, %v419
        %v452 = vmul.f32 %v308, %v420
        %v453 = vmul.f32 %v309, %v421
        %v454 = vmul.f32 %v310, %v422
        %v455 = vmul.f32 %v311, %v423
        %v456 = vmul.f32 %v312, %v424
        %v457 = vmul.f32 %v313, %v425
        %v458 = vmul.f32 %v314, %v426
        %v459 = vmul.f32 %v315, %v427
        %v460 = vmul.f32 %v316, %v428
        %v461 = vmul.f32 %v317, %v413
        %v462 = vmul.f32 %v318, %v414
        %v463 = vmul.f32 %v319, %v415
        %v464 = vmul.f32 %v320, %v416
        %v465 = vmul.f32 %v321, %v417
        %v466 = vmul.f32 %v322, %v418
        %v467 = vmul.f32 %v323, %v419
        %v468 = vmul.f32 %v324, %v420
        %v469 = vmul.f32 %v325, %v421
        %v470 = vmul.f32 %v326, %v422
        %v471 = vmul.f32 %v327, %v423
        %v472 = vmul.f32 %v328, %v424
        %v473 = vmul.f32 %v329, %v425
        %v474 = vmul.f32 %v330, %v426
        %v475 = vmul.f32 %v331, %v427
        %v476 = vmul.f32 %v332, %v428
        %v477 = vmul.f32 %v333, %v413
        %v478 = vmul.f32 %v334, %v414
        %v479 = vmul.f32 %v335, %v415
        %v480 = vmul.f32 %v336, %v416
        %v481 = vmul.f32 %v337, %v417
        %v482 = vmul.f32 %v338, %v418
        %v483 = vmul.f32 %v339, %v419
        %v484 = vmul.f32 %v340, %v420
        %v485 = vmul.f32 %v341, %v421
        %v486 = vmul.f32 %v342, %v422
        %v487 = vmul.f32 %v343, %v423
        %v488 = vmul.f32 %v344, %v424
        %v489 = vmul.f32 %v345, %v425
        %v490 = vmul.f32 %v346, %v426
        %v491 = vmul.f32 %v347, %v427
        %v492 = vmul.f32 %v348, %v428
        %v493 = vmul.f32 %v349, %v413
        %v494 = vmul.f32 %v350, %v414
        %v495 = vmul.f32 %v351, %v415
        %v496 = vmul.f32 %v352, %v416
        %v497 = vmul.f32 %v353, %v417
        %v498 = vmul.f32 %v354, %v418
        %v499 = vmul.f32 %v355, %v419
        %v500 = vmul.f32 %v356, %v420
        %v501 = vmul.f32 %v357, %v421
        %v502 = vmul.f32 %v358, %v422
        %v503 = vmul.f32 %v359, %v423
        %v504 = vmul.f32 %v360, %v424
        %v505 = vmul.f32 %v361, %v425
        %v506 = vmul.f32 %v362, %v426
        %v507 = vmul.f32 %v363, %v427
        %v508 = vmul.f32 %v364, %v428
        %v509 = vmul.f32 %v365, %v413
        %v510 = vmul.f32 %v366, %v414
        %v511 = vmul.f32 %v367, %v415
        %v512 = vmul.f32 %v368, %v416
        %v513 = vmul.f32 %v369, %v417
        %v514 = vmul.f32 %v370, %v418
        %v515 = vmul.f32 %v371, %v419
        %v516 = vmul.f32 %v372, %v420
        %v517 = vmul.f32 %v373, %v421
        %v518 = vmul.f32 %v374, %v422
        %v519 = vmul.f32 %v375, %v423
        %v520 = vmul.f32 %v376, %v424
        %v521 = vmul.f32 %v377, %v425
        %v522 = vmul.f32 %v378, %v426
        %v523 = vmul.f32 %v379, %v427
        %v524 = vmul.f32 %v380, %v428
        %v525 = vmul.f32 %v381, %v413
        %v526 = vmul.f32 %v382, %v414
        %v527 = vmul.f32 %v383, %v415
        %v528 = vmul.f32 %v384, %v416
        %v529 = vmul.f32 %v385, %v417
        %v530 = vmul.f32 %v386, %v418
        %v531 = vmul.f32 %v387, %v419
        %v532 = vmul.f32 %v388, %v420
        %v533 = vmul.f32 %v389, %v421
        %v534 = vmul.f32 %v390, %v422
        %v535 = vmul.f32 %v391, %v423
        %v536 = vmul.f32 %v392, %v424
        %v537 = vmul.f32 %v393, %v425
        %v538 = vmul.f32 %v394, %v426
        %v539 = vmul.f32 %v395, %v427
        %v540 = vmul.f32 %v396, %v428
        %v541 = vmul.f32 %v397, %v413
        %v542 = vmul.f32 %v398, %v414
        %v543 = vmul.f32 %v399, %v415
        %v544 = vmul.f32 %v400, %v416
        %v545 = vmul.f32 %v401, %v417
        %v546 = vmul.f32 %v402, %v418
        %v547 = vmul.f32 %v403, %v419
        %v548 = vmul.f32 %v404, %v420
        %v549 = vmul.f32 %v405, %v421
        %v550 = vmul.f32 %v406, %v422
        %v551 = vmul.f32 %v407, %v423
        %v552 = vmul.f32 %v408, %v424
        %v553 = vmul.f32 %v409, %v425
        %v554 = vmul.f32 %v410, %v426
        %v555 = vmul.f32 %v411, %v427
        %v556 = vmul.f32 %v412, %v428
        %v557 = vadd.f32 %v429, %v430
        %v558 = vadd.f32 %v557, %v431
        %v559 = vadd.f32 %v558, %v432
        %v560 = vadd.f32 %v559, %v433
        %v561 = vadd.f32 %v560, %v434
        %v562 = vadd.f32 %v561, %v435
        %v563 = vadd.f32 %v562, %v436
        %v564 = vadd.f32 %v563, %v437
        %v565 = vadd.f32 %v564, %v438
        %v566 = vadd.f32 %v565, %v439
        %v567 = vadd.f32 %v566, %v440
        %v568 = vadd.f32 %v567, %v441
        %v569 = vadd.f32 %v568, %v442
        %v570 = vadd.f32 %v569, %v443
        %v571 = vadd.f32 %v570, %v444
        %572 = vadd.xlane.f32.xlu0 %v571
        %v573 = vpop.xlane.xlu0 %572
        %v574 = vadd.f32 %v445, %v446
        %v575 = vadd.f32 %v574, %v447
        %v576 = vadd.f32 %v575, %v448
        %v577 = vadd.f32 %v576, %v449
        %v578 = vadd.f32 %v577, %v450
        %v579 = vadd.f32 %v578, %v451
        %v580 = vadd.f32 %v579, %v452
        %v581 = vadd.f32 %v580, %v453
        %v582 = vadd.f32 %v581, %v454
        %v583 = vadd.f32 %v582, %v455
        %v584 = vadd.f32 %v583, %v456
        %v585 = vadd.f32 %v584, %v457
        %v586 = vadd.f32 %v585, %v458
        %v587 = vadd.f32 %v586, %v459
        %v588 = vadd.f32 %v587, %v460
        %589 = vadd.xlane.f32.xlu0 %v588
        %v590 = vpop.xlane.xlu0 %589
        %v591 = vadd.f32 %v461, %v462
        %v592 = vadd.f32 %v591, %v463
        %v593 = vadd.f32 %v592, %v464
        %v594 = vadd.f32 %v593, %v465
        %v595 = vadd.f32 %v594, %v466
        %v596 = vadd.f32 %v595, %v467
        %v597 = vadd.f32 %v596, %v468
        %v598 = vadd.f32 %v597, %v469
        %v599 = vadd.f32 %v598, %v470
        %v600 = vadd.f32 %v599, %v471
        %v601 = vadd.f32 %v600, %v472
        %v602 = vadd.f32 %v601, %v473
        %v603 = vadd.f32 %v602, %v474
        %v604 = vadd.f32 %v603, %v475
        %v605 = vadd.f32 %v604, %v476
        %606 = vadd.xlane.f32.xlu0 %v605
        %v607 = vpop.xlane.xlu0 %606
        %v608 = vadd.f32 %v477, %v478
        %v609 = vadd.f32 %v608, %v479
        %v610 = vadd.f32 %v609, %v480
        %v611 = vadd.f32 %v610, %v481
        %v612 = vadd.f32 %v611, %v482
        %v613 = vadd.f32 %v612, %v483
        %v614 = vadd.f32 %v613, %v484
        %v615 = vadd.f32 %v614, %v485
        %v616 = vadd.f32 %v615, %v486
        %v617 = vadd.f32 %v616, %v487
        %v618 = vadd.f32 %v617, %v488
        %v619 = vadd.f32 %v618, %v489
        %v620 = vadd.f32 %v619, %v490
        %v621 = vadd.f32 %v620, %v491
        %v622 = vadd.f32 %v621, %v492
        %623 = vadd.xlane.f32.xlu0 %v622
        %v624 = vpop.xlane.xlu0 %623
        %v625 = vadd.f32 %v493, %v494
        %v626 = vadd.f32 %v625, %v495
        %v627 = vadd.f32 %v626, %v496
        %v628 = vadd.f32 %v627, %v497
        %v629 = vadd.f32 %v628, %v498
        %v630 = vadd.f32 %v629, %v499
        %v631 = vadd.f32 %v630, %v500
        %v632 = vadd.f32 %v631, %v501
        %v633 = vadd.f32 %v632, %v502
        %v634 = vadd.f32 %v633, %v503
        %v635 = vadd.f32 %v634, %v504
        %v636 = vadd.f32 %v635, %v505
        %v637 = vadd.f32 %v636, %v506
        %v638 = vadd.f32 %v637, %v507
        %v639 = vadd.f32 %v638, %v508
        %640 = vadd.xlane.f32.xlu0 %v639
        %v641 = vpop.xlane.xlu0 %640
        %v642 = vadd.f32 %v509, %v510
        %v643 = vadd.f32 %v642, %v511
        %v644 = vadd.f32 %v643, %v512
        %v645 = vadd.f32 %v644, %v513
        %v646 = vadd.f32 %v645, %v514
        %v647 = vadd.f32 %v646, %v515
        %v648 = vadd.f32 %v647, %v516
        %v649 = vadd.f32 %v648, %v517
        %v650 = vadd.f32 %v649, %v518
        %v651 = vadd.f32 %v650, %v519
        %v652 = vadd.f32 %v651, %v520
        %v653 = vadd.f32 %v652, %v521
        %v654 = vadd.f32 %v653, %v522
        %v655 = vadd.f32 %v654, %v523
        %v656 = vadd.f32 %v655, %v524
        %657 = vadd.xlane.f32.xlu0 %v656
        %v658 = vpop.xlane.xlu0 %657
        %v659 = vadd.f32 %v525, %v526
        %v660 = vadd.f32 %v659, %v527
        %v661 = vadd.f32 %v660, %v528
        %v662 = vadd.f32 %v661, %v529
        %v663 = vadd.f32 %v662, %v530
        %v664 = vadd.f32 %v663, %v531
        %v665 = vadd.f32 %v664, %v532
        %v666 = vadd.f32 %v665, %v533
        %v667 = vadd.f32 %v666, %v534
        %v668 = vadd.f32 %v667, %v535
        %v669 = vadd.f32 %v668, %v536
        %v670 = vadd.f32 %v669, %v537
        %v671 = vadd.f32 %v670, %v538
        %v672 = vadd.f32 %v671, %v539
        %v673 = vadd.f32 %v672, %v540
        %674 = vadd.xlane.f32.xlu0 %v673
        %v675 = vpop.xlane.xlu0 %674
        %v676 = vadd.f32 %v541, %v542
        %v677 = vadd.f32 %v676, %v543
        %v678 = vadd.f32 %v677, %v544
        %v679 = vadd.f32 %v678, %v545
        %v680 = vadd.f32 %v679, %v546
        %v681 = vadd.f32 %v680, %v547
        %v682 = vadd.f32 %v681, %v548
        %v683 = vadd.f32 %v682, %v549
        %v684 = vadd.f32 %v683, %v550
        %v685 = vadd.f32 %v684, %v551
        %v686 = vadd.f32 %v685, %v552
        %v687 = vadd.f32 %v686, %v553
        %v688 = vadd.f32 %v687, %v554
        %v689 = vadd.f32 %v688, %v555
        %v690 = vadd.f32 %v689, %v556
        %691 = vadd.xlane.f32.xlu0 %v690
        %v692 = vpop.xlane.xlu0 %691
        %v693 = vld [vmem:[#allocation5] sm:$0xff]
        %v694 = vld [vmem:[%s2] sm:$0x1]
        %v696 = vlaneseq
        %v697 = vshrl.u32 %v696, 7
        %v698 = vsub.s32 0, %v697
        %v699 = vrot.slane %v694, %v698
        %v709 = vlaneseq
        %v710 = vand.u32 %v709, 127
        %v711 = vlaneseq
        %v712 = vshrl.u32 %v711, 7
        %v713 = vsub.s32 %v710, %v712
        %v714 = vrot.slane %v573, %v713
        %v715 = vlaneseq
        %v716 = vshrl.u32 %v715, 7
        %v717 = vsub.s32 %v710, %v716
        %v718 = vrot.slane %v590, %v717
        %v719 = vlaneseq
        %v720 = vshrl.u32 %v719, 7
        %v721 = vsub.s32 %v710, %v720
        %v722 = vrot.slane %v607, %v721
        %v723 = vlaneseq
        %v724 = vshrl.u32 %v723, 7
        %v725 = vsub.s32 %v710, %v724
        %v726 = vrot.slane %v624, %v725
        %v727 = vlaneseq
        %v728 = vshrl.u32 %v727, 7
        %v729 = vsub.s32 %v710, %v728
        %v730 = vrot.slane %v641, %v729
        %v731 = vlaneseq
        %v732 = vshrl.u32 %v731, 7
        %v733 = vsub.s32 %v710, %v732
        %v734 = vrot.slane %v658, %v733
        %v735 = vlaneseq
        %v736 = vshrl.u32 %v735, 7
        %v737 = vsub.s32 %v710, %v736
        %v738 = vrot.slane %v675, %v737
        %v739 = vlaneseq
        %v740 = vshrl.u32 %v739, 7
        %v741 = vsub.s32 %v710, %v740
        %v742 = vrot.slane %v692, %v741
        %vm743 = vcmask 1041409
        %v744 = vsel %vm743, %v718, %v714
        %vm745 = vcmask 1042434
        %v746 = vsel %vm745, %v722, %v744
        %vm747 = vcmask 1043459
        %v748 = vsel %vm747, %v726, %v746
        %vm749 = vcmask 1044484
        %v750 = vsel %vm749, %v730, %v748
        %vm751 = vcmask 1045509
        %v752 = vsel %vm751, %v734, %v750
        %vm753 = vcmask 1046534
        %v754 = vsel %vm753, %v738, %v752
        %vm755 = vcmask 1047559
        %v756 = vsel %vm755, %v742, %v754
        %vm757 = vcmask 64512
        %v758 = vsel %vm757, %v756, 0
        %760 = vmatprep.subr.mxu0 0.0
        %761 = vmatpush1.msra.mxu0 %v693
        %762 = vmatprep.subr.mxu0 0.0
        %763 = vmatpush1.msra.mxu0 0.0
        %764 = vmatprep.subr.mxu0 0.0
        %765 = vmatpush1.msra.mxu0 0.0
        %766 = vmatprep.subr.mxu0 0.0
        %767 = vmatpush1.msra.mxu0 0.0
        %768 = vmatprep.subr.mxu0 0.0
        %769 = vmatpush1.msra.mxu0 0.0
        %770 = vmatprep.subr.mxu0 0.0
        %771 = vmatpush1.msra.mxu0 0.0
        %772 = vmatprep.subr.mxu0 0.0
        %773 = vmatpush1.msra.mxu0 0.0
        %774 = vmatprep.subr.mxu0 0.0
        %775 = vmatpush1.msra.mxu0 0.0
        %776 = vmatprep.subr.mxu0 0.0
        %777 = vmatpush1.msra.mxu0 0.0
        %778 = vmatprep.subr.mxu0 0.0
        %779 = vmatpush1.msra.mxu0 0.0
        %780 = vmatprep.subr.mxu0 0.0
        %781 = vmatpush1.msra.mxu0 0.0
        %782 = vmatprep.subr.mxu0 0.0
        %783 = vmatpush1.msra.mxu0 0.0
        %784 = vmatprep.subr.mxu0 0.0
        %785 = vmatpush1.msra.mxu0 0.0
        %786 = vmatprep.subr.mxu0 0.0
        %787 = vmatpush1.msra.mxu0 0.0
        %788 = vmatprep.subr.mxu0 0.0
        %789 = vmatpush1.msra.mxu0 0.0
        %790 = vmatprep.subr.mxu0 0.0
        %791 = vmatpush1.msra.mxu0 0.0
        %792 = vmatprep.subr.mxu0 0.0
        %793 = vmatpush1.msra.mxu0 0.0
        %794 = vmatprep.subr.mxu0 0.0
        %795 = vmatpush1.msra.mxu0 0.0
        %796 = vmatprep.subr.mxu0 0.0
        %797 = vmatpush1.msra.mxu0 0.0
        %798 = vmatprep.subr.mxu0 0.0
        %799 = vmatpush1.msra.mxu0 0.0
        %800 = vmatprep.subr.mxu0 0.0
        %801 = vmatpush1.msra.mxu0 0.0
        %802 = vmatprep.subr.mxu0 0.0
        %803 = vmatpush1.msra.mxu0 0.0
        %804 = vmatprep.subr.mxu0 0.0
        %805 = vmatpush1.msra.mxu0 0.0
        %806 = vmatprep.subr.mxu0 0.0
        %807 = vmatpush1.msra.mxu0 0.0
        %808 = vmatprep.subr.mxu0 0.0
        %809 = vmatpush1.msra.mxu0 0.0
        %810 = vmatprep.subr.mxu0 0.0
        %811 = vmatpush1.msra.mxu0 0.0
        %812 = vmatprep.subr.mxu0 0.0
        %813 = vmatpush1.msra.mxu0 0.0
        %814 = vmatprep.subr.mxu0 0.0
        %815 = vmatpush1.msra.mxu0 0.0
        %816 = vmatprep.subr.mxu0 0.0
        %817 = vmatpush1.msra.mxu0 0.0
        %818 = vmatprep.subr.mxu0 0.0
        %819 = vmatpush1.msra.mxu0 0.0
        %820 = vmatprep.subr.mxu0 0.0
        %821 = vmatpush1.msra.mxu0 0.0
        %822 = vmatprep.subr.mxu0 0.0
        %823 = vmatpush1.msra.mxu0 0.0
        %824 = vmatprep.mubr.f32.mxu0 0.0
        %825 = vmatmul.mubr.f32.gmra.mrb[0].mxu0 %v758
        %v826 = vpop.f32.mrb[0].mxu0
        %v827 = vadd.f32 %v699, %v826
        %v828 = vpop.f32.mrb[0].mxu0
        %829 = vdwg.mxu0
        %v830 = vld [vmem:[#allocation7] sm:$0xff]
        %v831 = vld [vmem:[#allocation7 + $0x8] sm:$0xff]
        %v832 = vld [vmem:[#allocation7 + $0x10] sm:$0xff]
        %v833 = vld [vmem:[#allocation7 + $0x18] sm:$0xff]
        %v834 = vld [vmem:[#allocation7 + $0x20] sm:$0xff]
        %v835 = vld [vmem:[#allocation7 + $0x28] sm:$0xff]
        %v836 = vld [vmem:[#allocation7 + $0x30] sm:$0xff]
        %v837 = vld [vmem:[#allocation7 + $0x38] sm:$0xff]
        %v838 = vld [vmem:[#allocation7 + $0x40] sm:$0xff]
        %v839 = vld [vmem:[#allocation7 + $0x48] sm:$0xff]
        %v840 = vld [vmem:[#allocation7 + $0x50] sm:$0xff]
        %v841 = vld [vmem:[#allocation7 + $0x58] sm:$0xff]
        %v842 = vld [vmem:[#allocation7 + $0x60] sm:$0xff]
        %v843 = vld [vmem:[#allocation7 + $0x68] sm:$0xff]
        %v844 = vld [vmem:[#allocation7 + $0x70] sm:$0xff]
        %v845 = vld [vmem:[#allocation7 + $0x78] sm:$0xff]
        %846 = vmatprep.subr.mxu0 0.0
        %847 = vmatpush1.msra.mxu0 %v830
        %848 = vmatprep.subr.mxu0 0.0
        %849 = vmatpush1.msra.mxu0 %v831
        %850 = vmatprep.subr.mxu0 0.0
        %851 = vmatpush1.msra.mxu0 %v832
        %852 = vmatprep.subr.mxu0 0.0
        %853 = vmatpush1.msra.mxu0 %v833
        %854 = vmatprep.subr.mxu0 0.0
        %855 = vmatpush1.msra.mxu0 %v834
        %856 = vmatprep.subr.mxu0 0.0
        %857 = vmatpush1.msra.mxu0 %v835
        %858 = vmatprep.subr.mxu0 0.0
        %859 = vmatpush1.msra.mxu0 %v836
        %860 = vmatprep.subr.mxu0 0.0
        %861 = vmatpush1.msra.mxu0 %v837
        %862 = vmatprep.subr.mxu0 0.0
        %863 = vmatpush1.msra.mxu0 %v838
        %864 = vmatprep.subr.mxu0 0.0
        %865 = vmatpush1.msra.mxu0 %v839
        %866 = vmatprep.subr.mxu0 0.0
        %867 = vmatpush1.msra.mxu0 %v840
        %868 = vmatprep.subr.mxu0 0.0
        %869 = vmatpush1.msra.mxu0 %v841
        %870 = vmatprep.subr.mxu0 0.0
        %871 = vmatpush1.msra.mxu0 %v842
        %872 = vmatprep.subr.mxu0 0.0
        %873 = vmatpush1.msra.mxu0 %v843
        %874 = vmatprep.subr.mxu0 0.0
        %875 = vmatpush1.msra.mxu0 %v844
        %876 = vmatprep.subr.mxu0 0.0
        %877 = vmatpush1.msra.mxu0 %v845
        %878 = vmatprep.subr.mxu0 0.0
        %879 = vmatpush1.msra.mxu0 0.0
        %880 = vmatprep.subr.mxu0 0.0
        %881 = vmatpush1.msra.mxu0 0.0
        %882 = vmatprep.subr.mxu0 0.0
        %883 = vmatpush1.msra.mxu0 0.0
        %884 = vmatprep.subr.mxu0 0.0
        %885 = vmatpush1.msra.mxu0 0.0
        %886 = vmatprep.subr.mxu0 0.0
        %887 = vmatpush1.msra.mxu0 0.0
        %888 = vmatprep.subr.mxu0 0.0
        %889 = vmatpush1.msra.mxu0 0.0
        %890 = vmatprep.subr.mxu0 0.0
        %891 = vmatpush1.msra.mxu0 0.0
        %892 = vmatprep.subr.mxu0 0.0
        %893 = vmatpush1.msra.mxu0 0.0
        %894 = vmatprep.subr.mxu0 0.0
        %895 = vmatpush1.msra.mxu0 0.0
        %896 = vmatprep.subr.mxu0 0.0
        %897 = vmatpush1.msra.mxu0 0.0
        %898 = vmatprep.subr.mxu0 0.0
        %899 = vmatpush1.msra.mxu0 0.0
        %900 = vmatprep.subr.mxu0 0.0
        %901 = vmatpush1.msra.mxu0 0.0
        %902 = vmatprep.subr.mxu0 0.0
        %903 = vmatpush1.msra.mxu0 0.0
        %904 = vmatprep.subr.mxu0 0.0
        %905 = vmatpush1.msra.mxu0 0.0
        %906 = vmatprep.subr.mxu0 0.0
        %907 = vmatpush1.msra.mxu0 0.0
        %908 = vmatprep.subr.mxu0 0.0
        %909 = vmatpush1.msra.mxu0 0.0
        %910 = vmatprep.mubr.f32.mxu0 0.0
        %911 = vmatmul.mubr.f32.gmra.mrb[0].mxu0 %v827
        %v912 = vpop.f32.mrb[0].mxu0
        %v913 = vadd.f32 0.0, %v912
        %v914 = vpop.f32.mrb[0].mxu0
        %915 = vdwg.mxu0
        %v916 = vxor.u32 %v913, 2147483648
        %v917 = vmul.f32 %v916, 1.442695
        %v918 = vpow.pop %v917
        %v919 = vadd.f32 %v918, 1.0
        %v920 = vrcp.pop %v919
        %v921 = vmul.f32 1.0, %v920
        %v922 = vmul.f32 %v921, %v827
        %923 = vadd.xlane.f32.xlu0 %v922
        %v924 = vpop.xlane.xlu0 %923
        %vm925 = vcmp.eq.s32.totalorder %v710, 4
        %v926 = vsel %vm925, 1.0, 0.0
        %v927 = vmul.f32 %v924, %v926
        %v928 = vadd.f32 %v827, %v927
        %929 = vst [vmem:[%s283] sm:$0xff] %v928
        %s930 = sand.u32 %s142, 1
        %s931 = scalar_lea.sflag [#allocation4], %s930
        %s932 = sand.u32 %s142, 1
        %s933 = smul.addr %s932, 8
        %s934 = scalar_lea.vmem [#allocation10], %s933
        // Predicated region
        $region57: #{tpu_custom_call.1} parent=39 // pred_check
          %p935 = pneg %p152
        $region58: #{tpu_custom_call.1} parent=39 // pred_check_branch
          %937 = sbr.rel (%p935) target = $region60
        $region59: #{tpu_custom_call.1} parent=39 // pred_region
          %s939 = ssub.s32 128, 128
          %940 = vsyncadd %s931, %s939
          %s941 = smul.addr %s24, 128
          %s942 = scalar_lea.hbm %s5, %s941
          %s944 = sshll.u32 %s934, 4
          %s945 = int_to_ptr.vmem [resolvable:$true] %s944
          %947 = dma.vmem_to_hbm [thread:$0]  %s945, 128, %s942, %s931
        $region60: #{tpu_custom_call.1} parent=39 // pred_fallthru
          _
      $region40: #{tpu_custom_call.1} parent=5 // pred_fallthru
        _
      %p948 = scmp.le.s32.totalorder 2, %s19
      // Predicated region
      $region61: #{tpu_custom_call.1} parent=5 // pred_check
        %p949 = pneg %p948
      $region62: #{tpu_custom_call.1} parent=5 // pred_check_branch
        %951 = sbr.rel (%p949) target = $region64
      $region63: #{tpu_custom_call.1} parent=5 // pred_region
        %s952 = ssub.s32 %s19, 2
        // Predicated region
        $region65: #{tpu_custom_call.1} parent=63 // pred_check
          %p953 = pneg %p158
        $region66: #{tpu_custom_call.1} parent=63 // pred_check_branch
          %955 = sbr.rel (%p953) target = $region68
        $region67: #{tpu_custom_call.1} parent=63 // pred_region
          %s956 = sand.u32 %s143, 1
          %s957 = scalar_lea.sflag [#allocation4], %s956
          %s958 = sand.u32 %s143, 1
          %s959 = smul.addr %s958, 8
          %s960 = scalar_lea.vmem [#allocation10], %s959
          %961 = dma.done %s957, 128
        $region68: #{tpu_custom_call.1} parent=63 // pred_fallthru
          _
      $region64: #{tpu_custom_call.1} parent=5 // pred_fallthru
        _
    $region6: #{tpu_custom_call.1} parent=1 // loop_footer
      %s23 = sadd.s32 1, %s19
    $region7: #{tpu_custom_call.1} parent=1 // loop_footer_branch
      %18 = sbr.rel target = $region3
    $region8: #{tpu_custom_call.1} parent=1 // loop_exit
      _
    %962 = vsyncpa [#allocation3], 1
    %s963 = scalar_lea.sflag [#allocation3], 1
    %964 = vsyncpa %s963, 1
    %965 = vsyncpa [#allocation6], 1
    %966 = vsyncpa [#allocation9], 1
    %s967 = scalar_lea.sflag [#allocation9], 1
    %968 = vsyncpa %s967, 1
    %969 = vsyncpa [#allocation4], 1
    %s970 = scalar_lea.sflag [#allocation4], 1
    %971 = vsyncpa %s970, 1

</llo_original>
